<compile_context>
chip_gen: v7x
topology: tpu7x:2x2x1
jax: 0.10.0
libtpu: 0.0.40
codegen_flags: <defaults>
</compile_context>

<pallas_src>
import functools

import jax
import jax.numpy as jnp
from jax import lax
from jax.experimental import pallas as pl
from jax.experimental.pallas import tpu as pltpu

L_IN = 673                      # forced by lin1.in_features == 664
L3 = (L_IN - 5) // 2 + 1        # 335  (conv3: k=5, stride=2, pad=0)
L4 = (L3 - 5) // 2 + 1          # 166  (conv4: k=5, stride=2, pad=0)
assert 4 * L4 == 664

LP1 = 768                       # lane-padded length for conv1/conv2 domain (6*128)
LP3 = 384                       # lane-padded length for conv3 output domain (3*128)
LP4 = 256                       # lane-padded length for conv4 output domain (2*128)
CIN_PAD = 8                     # conv1 input channels padded 6 -> 8 (sublane tile)

NEG_SLOPE = 0.2


def _leaky(v):
    return jnp.where(v > 0, v, NEG_SLOPE * v)


# ---------------------------------------------------------------------------
# One-time probe: determine pltpu.roll's direction convention on this backend.
# ---------------------------------------------------------------------------
_ROLL_IS_JNP = None


def _probe_roll_is_jnp():
    """True if pltpu.roll(x, s) == jnp.roll(x, s) (result[i] = x[(i - s) % n])."""
    global _ROLL_IS_JNP
    if _ROLL_IS_JNP is None:
        xs = jnp.arange(8 * 128, dtype=jnp.float32).reshape(8, 128)

        def k(x_ref, o_ref):
            o_ref[...] = pltpu.roll(x_ref[...], 1, axis=1)

        out = pl.pallas_call(
            k, out_shape=jax.ShapeDtypeStruct((8, 128), jnp.float32))(xs)
        _ROLL_IS_JNP = bool(out[0, 0] == xs[0, 127])
    return _ROLL_IS_JNP


def _shift_lanes(v, s, roll_is_jnp):
    """result[:, i] = v[:, (i + s) mod n].  Wrapped columns are either zero
    padding (stride-1 convs) or decimated away (stride-2 convs)."""
    n = v.shape[1]
    if s % n == 0:
        return v
    amt = (-s) % n if roll_is_jnp else s % n
    return pltpu.roll(v, amt, axis=1)


def _taps(v, shifts, roll_is_jnp):
    """Stack lane-shifted copies of v along sublanes -> (len(shifts)*C, n)."""
    return jnp.concatenate(
        [_shift_lanes(v, s, roll_is_jnp) for s in shifts], axis=0)


# ---------------------------------------------------------------------------
# Kernel
# ---------------------------------------------------------------------------
def qnet_kernel(roll_is_jnp,
                x_ref,
                w1_ref, b1_ref, w2_ref, b2_ref,
                w3_ref, b3_ref, w4_ref, b4_ref,
                s3_ref, s4_ref,
                wl1_ref, bl1_ref, wl2_ref, bl2_ref,
                out_ref):
    f32 = jnp.float32
    x = x_ref[0]                                                  # (8, LP1)

    # ---- conv1: 6->16, k=5, stride=1, pad=2 (mask pre-folded into weights) ----
    slab1 = _taps(x, [-2, -1, 0, 1, 2], roll_is_jnp)              # (40, LP1)
    c1 = _leaky(jnp.dot(w1_ref[...], slab1, preferred_element_type=f32)
                + b1_ref[...])                                    # (16, LP1)
    # Re-zero the tail columns so they act as conv2's zero padding.
    lane = lax.broadcasted_iota(jnp.int32, c1.shape, 1)
    c1 = jnp.where(lane < L_IN, c1, 0.0)

    # ---- conv2: 16->32, k=5, stride=1, pad=2 ----
    slab2 = _taps(c1, [-2, -1, 0, 1, 2], roll_is_jnp)             # (80, LP1)
    c2 = _leaky(jnp.dot(w2_ref[...], slab2, preferred_element_type=f32)
                + b2_ref[...])                                    # (32, LP1)

    # ---- conv3: 32->16, k=5, stride=2, pad=0 ----
    # Full stride-1 taps, then decimate columns with the 0/1 selection matmul.
    slab3 = _taps(c2, [0, 1, 2, 3, 4], roll_is_jnp)               # (160, LP1)
    t3 = jnp.dot(w3_ref[...], slab3, preferred_element_type=f32)  # (16, LP1)
    c3 = _leaky(jnp.dot(t3, s3_ref[...], preferred_element_type=f32)
                + b3_ref[...])                                    # (16, LP3)

    # ---- conv4: 16->4, k=5, stride=2, pad=0 ----
    slab4 = _taps(c3, [0, 1, 2, 3, 4], roll_is_jnp)               # (80, LP3)
    t4 = jnp.dot(w4_ref[...], slab4, preferred_element_type=f32)  # (4, LP3)
    c4 = _leaky(jnp.dot(t4, s4_ref[...], preferred_element_type=f32)
                + b4_ref[...])                                    # (4, LP4)

    # ---- lin1: 664 -> 128.  PyTorch's channel-major flatten == per-channel
    # lane-dense dots (weights zero-padded past L4), summed as a tree. ----
    p0 = jnp.dot(c4[0:1, :], wl1_ref[0], preferred_element_type=f32)  # (1,128)
    p1 = jnp.dot(c4[1:2, :], wl1_ref[1], preferred_element_type=f32)
    p2 = jnp.dot(c4[2:3, :], wl1_ref[2], preferred_element_type=f32)
    p3 = jnp.dot(c4[3:4, :], wl1_ref[3], preferred_element_type=f32)
    l1 = _leaky(bl1_ref[...] + (p0 + p1) + (p2 + p3))             # (1, 128)

    # ---- lin2: 128 -> 7 ----
    l2 = jnp.dot(l1, wl2_ref[...], preferred_element_type=f32) + bl2_ref[...]  # (1,7)

    out_ref[0] = l2


# ---------------------------------------------------------------------------
# Wrapper
# ---------------------------------------------------------------------------
def qnet_forward(x, params):
    B, L, _ = x.shape
    assert L == L_IN
    f32 = jnp.float32

    roll_is_jnp = _probe_roll_is_jnp()

    # --- one-time parameter repack (wrapper side, plain XLA) ---
    # conv weights (Cout, Cin, K) -> (Cout, K*Cin); mask folded into conv1.
    w1m = jnp.einsum('ij,ojk->oik', params['mask'], params['w1'])      # (16,6,5)
    w1p = jnp.pad(w1m, ((0, 0), (0, CIN_PAD - 6), (0, 0)))             # (16,8,5)
    W1f = jnp.transpose(w1p, (0, 2, 1)).reshape(16, 5 * CIN_PAD)
    W2f = jnp.transpose(params['w2'], (0, 2, 1)).reshape(32, 5 * 16)
    W3f = jnp.transpose(params['w3'], (0, 2, 1)).reshape(16, 5 * 32)
    W4f = jnp.transpose(params['w4'], (0, 2, 1)).reshape(4, 5 * 16)
    b1k = params['b1'].reshape(16, 1)
    b2k = params['b2'].reshape(32, 1)
    b3k = params['b3'].reshape(16, 1)
    b4k = params['b4'].reshape(4, 1)

    # 0/1 column-selection (decimation) matrices for the stride-2 convs.
    S3 = (jnp.arange(LP1)[:, None] == 2 * jnp.arange(LP3)[None, :]).astype(f32)
    S4 = (jnp.arange(LP3)[:, None] == 2 * jnp.arange(LP4)[None, :]).astype(f32)

    # lin1.weight is (128, 664) with flat index f = c*166 + l (PyTorch .view).
    wl1k = params['lw1'].reshape(128, 4, L4).transpose(1, 2, 0)        # (4,166,128)
    wl1k = jnp.pad(wl1k, ((0, 0), (0, LP4 - L4), (0, 0)))              # (4,256,128)
    bl1k = params['lb1'].reshape(1, 128)
    wl2k = params['lw2'].T                                             # (128, 7)
    bl2k = params['lb2'].reshape(1, 7)

    # x: (B, L, 6) -> channels-first, pad channels 6->8 and length 673->768.
    xk = jnp.zeros((B, CIN_PAD, LP1), f32)
    xk = xk.at[:, :6, :L_IN].set(jnp.transpose(x, (0, 2, 1)))

    def full(shape):
        n = len(shape)
        return pl.BlockSpec(shape, lambda b, _n=n: (0,) * _n)

    in_specs = [
        pl.BlockSpec((1, CIN_PAD, LP1), lambda b: (b, 0, 0)),   # x
        full((16, 5 * CIN_PAD)), full((16, 1)),                 # conv1
        full((32, 80)), full((32, 1)),                          # conv2
        full((16, 160)), full((16, 1)),                         # conv3
        full((4, 80)), full((4, 1)),                            # conv4
        full((LP1, LP3)), full((LP3, LP4)),                     # decimation S3, S4
        full((4, LP4, 128)), full((1, 128)),                    # lin1
        full((128, 7)), full((1, 7)),                           # lin2
    ]
    out_spec = pl.BlockSpec((1, 1, 7), lambda b: (b, 0, 0))

    kernel = functools.partial(qnet_kernel, roll_is_jnp)

    out = pl.pallas_call(
        kernel,
        out_shape=jax.ShapeDtypeStruct((B, 1, 7), f32),
        grid_spec=pltpu.PrefetchScalarGridSpec(
            num_scalar_prefetch=0,
            grid=(B,),
            in_specs=in_specs,
            out_specs=out_spec,
        ),
        compiler_params=pltpu.CompilerParams(
            dimension_semantics=("parallel",)),     # one sample per TC on v7x
    )(xk, W1f, b1k, W2f, b2k, W3f, b3k, W4f, b4k,
      S3, S4, wl1k, bl1k, wl2k, bl2k)

    return out[:, 0, :]                             # (B, 7)


# ---------------------------------------------------------------------------
# Parameters / pure-JAX reference
# ---------------------------------------------------------------------------
def init_params(key):
    ks = jax.random.split(key, 12)

    def uni(k, shape, fan_in):
        bound = 1.0 / float(fan_in) ** 0.5
        return jax.random.uniform(k, shape, jnp.float32, -bound, bound)

    params = dict(
        w1=uni(ks[0], (16, 6, 5), 6 * 5),   b1=uni(ks[1], (16,), 6 * 5),
        w2=uni(ks[2], (32, 16, 5), 16 * 5), b2=uni(ks[3], (32,), 16 * 5),
        w3=uni(ks[4], (16, 32, 5), 32 * 5), b3=uni(ks[5], (16,), 32 * 5),
        w4=uni(ks[6], (4, 16, 5), 16 * 5),  b4=uni(ks[7], (4,), 16 * 5),
        lw1=uni(ks[8], (128, 664), 664),    lb1=uni(ks[9], (128,), 664),
        lw2=uni(ks[10], (7, 128), 128),     lb2=uni(ks[11], (7,), 128),
        mask=jnp.diag(jnp.array([0.01, 0.05, 0.01, 0.05, 0.01, 0.05],
                                jnp.float32)),
    )
    return params


def reference_forward(x, p):
    """Pure-JAX reference mirroring the PyTorch forward (NCW convs)."""
    x1 = jnp.matmul(x, p['mask'], precision=lax.Precision.HIGHEST)
    h = jnp.transpose(x1, (0, 2, 1))                      # (B, 6, L)

    def conv(h, w, b, stride, pad):
        y = lax.conv_general_dilated(
            h, w, window_strides=(stride,), padding=[(pad, pad)],
            dimension_numbers=('NCH', 'OIH', 'NCH'),
            precision=lax.Precision.HIGHEST)
        return y + b[None, :, None]

    lr = lambda v: jnp.where(v > 0, v, NEG_SLOPE * v)
    c1 = lr(conv(h, p['w1'], p['b1'], 1, 2))
    c2 = lr(conv(c1, p['w2'], p['b2'], 1, 2))
    c3 = lr(conv(c2, p['w3'], p['b3'], 2, 0))
    c4 = lr(conv(c3, p['w4'], p['b4'], 2, 0))
    flat = c4.reshape(x.shape[0], -1)                     # channel-major flatten
    l1 = lr(jnp.matmul(flat, p['lw1'].T, precision=lax.Precision.HIGHEST)
            + p['lb1'])
    return jnp.matmul(l1, p['lw2'].T, precision=lax.Precision.HIGHEST) + p['lb2']


if __name__ == "__main__":
    key = jax.random.PRNGKey(0)
    pkey, xkey = jax.random.split(key)
    params = init_params(pkey)

    B = 2
    x = jax.random.normal(xkey, (B, L_IN, 6), dtype=jnp.float32)

    out = qnet_forward(x, params)
    out = jax.block_until_ready(out)
    assert out.shape == (B, 7), out.shape

    ref = reference_forward(x, params)
    if not bool(jnp.allclose(out, ref, rtol=5e-3, atol=1e-3)):
        raise AssertionError(
            f"mismatch: max abs err {float(jnp.max(jnp.abs(out - ref)))}")

    print("KERNEL_OK")
</pallas_src>

<mosaic_0001>
module attributes {stable_mosaic.version = 11 : i64} {
  func.func @k(%arg0: memref<8x128xf32, #tpu.memory_space<vmem>>, %arg1: memref<8x128xf32, #tpu.memory_space<vmem>>) attributes {dimension_semantics = [], scalar_prefetch = 0 : i64, scratch_operands = 0 : i64, tpu.core_type = #tpu.core_type<tc>} {
    %c0 = arith.constant 0 : index
    %c0_0 = arith.constant 0 : index
    %0 = vector.load %arg0[%c0, %c0_0] : memref<8x128xf32, #tpu.memory_space<vmem>>, vector<8x128xf32>
    %c1_i32 = arith.constant 1 : i32
    %1 = tpu.dynamic_rotate %0 by %c1_i32 dim 1 : vector<8x128xf32>, i32 -> vector<8x128xf32>
    %c0_1 = arith.constant 0 : index
    %c0_2 = arith.constant 0 : index
    %2 = vector.load %arg1[%c0_1, %c0_2] : memref<8x128xf32, #tpu.memory_space<vmem>>, vector<8x128xf32>
    tpu.vector_store %arg1[%c0_1, %c0_2], %1 {strides = array<i32>} : memref<8x128xf32, #tpu.memory_space<vmem>>, vector<8x128xf32>,
    return
  }
}

</mosaic_0001>

<llo_original>
// kernel: tpu_custom_call.1
$region0: #{tpu_custom_call.1}
  #allocation0 [shape = 'u32[]', space=smem, size = 0x4, offset = 0x4, fixed_abs, tag = 'smem constant byte address 0x4 - core index']
  #allocation1 [shape = 'u32[144,128]{1,0:T(1,128)}', space=vmem, size = 0x12000, scoped, tag = 'internal scratch']
  %s0 = inlined_call_operand.hbm [shape: f32[8,128], index: 0, kind: input, shape index: {}]
  %s1 = inlined_call_operand.hbm [shape: f32[8,128], index: 1, kind: output, shape index: {}]
  %s2 = sld [smem:[#allocation0]]
  $region18: #{tpu_custom_call.1} parent=0
    _
  %s4 = ssub.s32 1, %s2
  %s5 = scalar_select 0, %s4, %s2
  $region1: #{tpu_custom_call.1} parent=0
    #allocation2 [shape = 'u8[4096]{0}', space=vmem, size = 0x1000, scoped, tag = 'input window, operand 0, single buffered']
    #allocation3 [shape = 's32[1]{0}', space=sflag, size = 0x4, scoped, tag = 'scoped memory for tpu_custom_call.1']
    #allocation4 [shape = 's32[1]{0}', space=sflag, size = 0x4, scoped, tag = 'scoped memory for tpu_custom_call.1']
    #allocation5 [shape = 'u8[4096]{0}', space=vmem, size = 0x1000, scoped, tag = 'output window, operand 0, single buffered']
    %6 = vsyncpa [#allocation3], 0
    %7 = vsyncpa [#allocation4], 0
    // Predicated region
    $region2: #{tpu_custom_call.1} parent=1 // pred_check
      _
    $region3: #{tpu_custom_call.1} parent=1 // pred_check_branch
      %9 = sbr.rel (0) target = $region5
    $region4: #{tpu_custom_call.1} parent=1 // pred_region
      %s11 = ssub.s32 128, 128
      %12 = vsyncadd [#allocation3], %s11
      %s14 = sshll.u32 [#allocation2], 4
      %s15 = int_to_ptr.vmem [resolvable:$true] %s14
      %17 = dma.hbm_to_vmem [thread:$0]  %s0, 128, %s15, [#allocation3]
    $region5: #{tpu_custom_call.1} parent=1 // pred_fallthru
      _
    // Predicated region
    $region6: #{tpu_custom_call.1} parent=1 // pred_check
      _
    $region7: #{tpu_custom_call.1} parent=1 // pred_check_branch
      %19 = sbr.rel (0) target = $region9
    $region8: #{tpu_custom_call.1} parent=1 // pred_region
      %20 = dma.done [#allocation3], 128
    $region9: #{tpu_custom_call.1} parent=1 // pred_fallthru
      _
    %v21 = vld [vmem:[#allocation2] sm:$0xff]
    %22 = vrot.lane.b32.xlu0 %v21, 1
    %v23 = vpop.permute.xlu0 %22
    %24 = vst [vmem:[#allocation5] sm:$0xff] %v23
    // Predicated region
    $region10: #{tpu_custom_call.1} parent=1 // pred_check
      _
    $region11: #{tpu_custom_call.1} parent=1 // pred_check_branch
      %26 = sbr.rel (0) target = $region13
    $region12: #{tpu_custom_call.1} parent=1 // pred_region
      %s28 = ssub.s32 128, 128
      %29 = vsyncadd [#allocation4], %s28
      %s31 = sshll.u32 [#allocation5], 4
      %s32 = int_to_ptr.vmem [resolvable:$true] %s31
      %34 = dma.vmem_to_hbm [thread:$0]  %s32, 128, %s1, [#allocation4]
    $region13: #{tpu_custom_call.1} parent=1 // pred_fallthru
      _
    // Predicated region
    $region14: #{tpu_custom_call.1} parent=1 // pred_check
      _
    $region15: #{tpu_custom_call.1} parent=1 // pred_check_branch
      %36 = sbr.rel (0) target = $region17
    $region16: #{tpu_custom_call.1} parent=1 // pred_region
      %37 = dma.done [#allocation4], 128
    $region17: #{tpu_custom_call.1} parent=1 // pred_fallthru
      _
    %38 = vsyncpa [#allocation3], 1
    %39 = vsyncpa [#allocation4], 1

</llo_original>
